<compile_context>
chip_gen: v7x
topology: tpu7x:2x2x1
jax: 0.10.0
libtpu: 0.0.40
codegen_flags: <defaults>
</compile_context>

<pallas_src>
import functools
import math

import jax
import jax.numpy as jnp
from jax.experimental import pallas as pl
from jax.experimental.pallas import tpu as pltpu

DIM_SCALE = 4                        # p1 = p2 = 4
NUM_CHUNKS = DIM_SCALE * DIM_SCALE   # 16
LN_EPS = 1e-5                        # torch.nn.LayerNorm default
STAT_LANES = 128                     # lane-padded width for per-chunk statistics


def _expand_ln_kernel(x_ref, w_ref, rm_ref, emg_ref, beta_ref, o_ref, *,
                      rows, width, dim):
    """One grid step = `rows` image rows x one p1 slice (4 chunks of dim lanes).

    x_ref   : (rows*width, dim)      input tokens (cast to bf16 in-kernel)
    w_ref   : (4, dim, 128+4*dim)    bf16 [mean-cols | expand] weights, VMEM-resident
    rm_ref  : (4*dim, 128)           bf16 block-diag reduce matrix (exact 1.0 entries)
    emg_ref : (128, 4*dim)           bf16 block-diag expand matrix with gamma folded in
    beta_ref: (1, 4*dim)             f32 beta tiled over the 4 p2 chunks
    o_ref   : (rows, width, 4*dim)   output block in final 'b (h p1)(w p2) c' layout
    """
    cd = DIM_SCALE * dim
    p1 = pl.program_id(1)

    x = x_ref[...].astype(jnp.bfloat16)                       # VPU cast, no extra pass
    w = w_ref[p1]                                             # (dim, 128+cd), resident
    # Main expand matmul (bf16 operands, f32 accumulation).  The first 128
    # output lanes carry the per-chunk means (mean columns folded into w).
    yf = jnp.dot(x, w, preferred_element_type=jnp.float32)    # (tm, 128+cd)
    mean = yf[:, :STAT_LANES]                                 # lanes >= 4 are exactly 0
    y = yf[:, STAT_LANES:]                                    # (tm, cd)

    # Per-chunk E[y^2] on the MXU with exact bf16 1.0 weights; /dim on the VPU.
    y2 = (y * y).astype(jnp.bfloat16)
    ey2 = jnp.dot(y2, rm_ref[...], preferred_element_type=jnp.float32) * (1.0 / dim)
    var = jnp.maximum(ey2 - mean * mean, 0.0)                 # guard tiny negatives
    rstd = jax.lax.rsqrt(var + LN_EPS)                        # EUP

    # Broadcast per-chunk scale/shift to cd lanes via bf16 expand matmuls
    # (gamma folded into emg) -> epilogue is a single FMA.
    scale = jnp.dot(rstd.astype(jnp.bfloat16), emg_ref[...],
                    preferred_element_type=jnp.float32)       # rstd * gamma
    shift = jnp.dot((mean * rstd).astype(jnp.bfloat16), emg_ref[...],
                    preferred_element_type=jnp.float32)       # mean * rstd * gamma
    out = (y * scale + (beta_ref[...] - shift)).astype(o_ref.dtype)

    # Single lane-dense full-block store; spatial rearrangement is done by the
    # output BlockSpec (no post-kernel transpose of the 16x tensor).
    o_ref[...] = out.reshape(rows, width, cd)


def _pick_rows(bh, w, max_tokens):
    """Rows per tile R and (possibly padded) BH.  Prefer R | BH with R*w % 8 == 0."""
    max_rows = max(1, max_tokens // w)
    best = None
    for cand in range(min(bh, max_rows), 0, -1):
        if bh % cand == 0 and (cand * w) % 8 == 0:
            best = cand
            break
    if best is None:
        # No divisor gives an 8-aligned tile: round rows up and pad BH instead
        # (bounded tile size -- never fall back to the full token extent).
        m = 8 // math.gcd(w, 8)                      # R must be a multiple of m
        best = max(m, (max_rows // m) * m)
        bh_pad = ((bh + best - 1) // best) * best
        return best, bh_pad
    # v7x megacore: prefer >= 2 row tiles so both TensorCores get work.
    if best == bh and bh % 2 == 0 and ((bh // 2) * w) % 8 == 0:
        best = bh // 2
    return best, bh


def final_patch_expand_x4(x, w_expand, gamma, beta, input_resolution, *,
                          target_tokens=2048, out_dtype=None):
    """x: (B, L, dim); w_expand: (16*dim, dim) [torch Linear layout];
    gamma, beta: (dim,).  Returns (B, 16*L, dim)."""
    H, W = input_resolution
    B, L, dim = x.shape
    assert L == H * W, "input feature has wrong size"
    assert w_expand.shape == (NUM_CHUNKS * dim, dim)
    if out_dtype is None:
        out_dtype = x.dtype

    CD = DIM_SCALE * dim
    CDW = STAT_LANES + CD
    BH = B * H

    # Keep the per-step working set comfortably inside the default scoped VMEM
    # on v5e (16 MiB) / v6e / v7x (32 MiB): input dbl-buf + matmul temporaries
    # + double-buffered output block.
    out_bytes = jnp.dtype(out_dtype).itemsize
    per_token = 4 * (2 * dim + 3 * CDW) + 2 * CD * out_bytes
    budget_tokens = max(W, (12 << 20) // per_token)
    R, BH_pad = _pick_rows(BH, W, min(target_tokens, budget_tokens))
    tm = R * W

    x_flat = x.reshape(BH * W, dim)                 # cast to bf16 happens in-kernel
    if BH_pad != BH:
        x_flat = jnp.pad(x_flat, ((0, (BH_pad - BH) * W), (0, 0)))

    # torch weight (16*dim, dim); out-channel o = p1*4*dim + p2*dim + c.
    wf = w_expand.astype(jnp.float32).reshape(DIM_SCALE, CD, dim)
    wt = jnp.transpose(wf, (0, 2, 1))                              # (4, dim, 4*dim)
    # Mean columns (per-chunk average of the expand columns), lane-padded to 128
    # and placed FIRST so both in-kernel slices start at lane-tile boundaries.
    wm = wt.reshape(DIM_SCALE, dim, DIM_SCALE, dim).mean(axis=-1)  # (4, dim, 4)
    wm_pad = jnp.zeros((DIM_SCALE, dim, STAT_LANES), jnp.float32)
    wm_pad = wm_pad.at[..., :DIM_SCALE].set(wm)
    w_full = jnp.concatenate([wm_pad, wt], axis=-1).astype(jnp.bfloat16)  # (4,dim,128+CD)

    eye = jnp.eye(DIM_SCALE, dtype=jnp.float32)
    # Block-diagonal reduce matrix with exact 1.0 entries (bf16-exact); /dim on VPU.
    rm = jnp.zeros((CD, STAT_LANES), jnp.float32).at[:, :DIM_SCALE].set(
        jnp.repeat(eye, dim, axis=0)).astype(jnp.bfloat16)
    # Block-diagonal expand matrix with gamma folded in.
    g_tiled = jnp.tile(gamma.astype(jnp.float32), DIM_SCALE)
    emg = jnp.zeros((STAT_LANES, CD), jnp.float32).at[:DIM_SCALE, :].set(
        jnp.repeat(eye, dim, axis=1) * g_tiled[None, :]).astype(jnp.bfloat16)
    b_tiled = jnp.tile(beta.astype(jnp.float32), DIM_SCALE).reshape(1, CD)

    kernel = functools.partial(_expand_ln_kernel, rows=R, width=W, dim=dim)

    out4 = pl.pallas_call(
        kernel,
        out_shape=jax.ShapeDtypeStruct((BH_pad, DIM_SCALE, W, CD), out_dtype),
        grid_spec=pltpu.PrefetchScalarGridSpec(
            num_scalar_prefetch=0,
            grid=(BH_pad // R, DIM_SCALE),                 # (row tiles, p1)
            in_specs=[
                pl.BlockSpec((tm, dim), lambda i, p: (i, 0)),              # x (resident over p)
                pl.BlockSpec((DIM_SCALE, dim, CDW), lambda i, p: (0, 0, 0)),  # weights, fetched once
                pl.BlockSpec((CD, STAT_LANES), lambda i, p: (0, 0)),       # reduce matrix
                pl.BlockSpec((STAT_LANES, CD), lambda i, p: (0, 0)),       # expand (gamma) matrix
                pl.BlockSpec((1, CD), lambda i, p: (0, 0)),                # beta
            ],
            out_specs=pl.BlockSpec((R, None, W, CD), lambda i, p: (i, p, 0, 0)),
        ),
        compiler_params=pltpu.CompilerParams(
            dimension_semantics=("parallel", "arbitrary")),
    )(x_flat, w_full, rm, emg, b_tiled)

    if BH_pad != BH:
        out4 = out4[:BH]
    # (BH, p1, W, (p2, c)) already has the 'b (h p1)(w p2) c' memory layout,
    # so this reshape is free.
    return out4.reshape(B, NUM_CHUNKS * L, dim)


def _reference(x, w_expand, gamma, beta, input_resolution):
    """Pure-JAX f32 reference matching the PyTorch forward."""
    H, W = input_resolution
    B, L, dim = x.shape
    y = jnp.einsum("bld,cd->blc", x, w_expand)                 # Linear, no bias
    y = y.reshape(B, H, W, DIM_SCALE, DIM_SCALE, dim)
    y = jnp.transpose(y, (0, 1, 3, 2, 4, 5)).reshape(B, NUM_CHUNKS * L, dim)
    mean = jnp.mean(y, axis=-1, keepdims=True)
    var = jnp.mean((y - mean) ** 2, axis=-1, keepdims=True)
    return (y - mean) * jax.lax.rsqrt(var + LN_EPS) * gamma + beta


if __name__ == "__main__":
    B, H, W, dim = 2, 8, 8, 32
    L = H * W

    key = jax.random.PRNGKey(0)
    kx, kw = jax.random.split(key)
    x = jax.random.normal(kx, (B, L, dim), dtype=jnp.float32)
    # nn.Linear(dim, 16*dim, bias=False): weight shape (16*dim, dim)
    w_expand = jax.random.normal(kw, (NUM_CHUNKS * dim, dim), dtype=jnp.float32) * 0.05
    gamma = jnp.ones((dim,), jnp.float32)      # nn.LayerNorm default init
    beta = jnp.zeros((dim,), jnp.float32)

    ref = _reference(x, w_expand, gamma, beta, (H, W))

    # f32 output (default): matches module semantics up to bf16 MXU operands.
    out = final_patch_expand_x4(x, w_expand, gamma, beta, (H, W))
    out = jax.block_until_ready(out)
    assert out.shape == (B, NUM_CHUNKS * L, dim), out.shape
    err = float(jnp.max(jnp.abs(out.astype(jnp.float32) - ref)))
    assert jnp.allclose(out.astype(jnp.float32), ref, atol=3e-2, rtol=3e-2), err

    # bf16 output variant (halves HBM writeback of the 16x tensor; v5e default pick).
    out_bf16 = final_patch_expand_x4(x, w_expand, gamma, beta, (H, W),
                                     out_dtype=jnp.bfloat16)
    out_bf16 = jax.block_until_ready(out_bf16)
    err_bf16 = float(jnp.max(jnp.abs(out_bf16.astype(jnp.float32) - ref)))
    assert jnp.allclose(out_bf16.astype(jnp.float32), ref,
                        atol=8e-2, rtol=8e-2), err_bf16

    print("KERNEL_OK")
</pallas_src>

<mosaic_0001>
module attributes {stable_mosaic.version = 11 : i64} {
  func.func @_expand_ln_kernel(%arg0: i32, %arg1: i32, %arg2: memref<64x32xf32, #tpu.memory_space<vmem>>, %arg3: memref<4x32x256xbf16, #tpu.memory_space<vmem>>, %arg4: memref<128x128xbf16, #tpu.memory_space<vmem>>, %arg5: memref<128x128xbf16, #tpu.memory_space<vmem>>, %arg6: memref<1x128xf32, #tpu.memory_space<vmem>>, %arg7: memref<8x1x8x128xf32, #tpu.memory_space<vmem>>) attributes {dimension_semantics = [#tpu.dimension_semantics<parallel>, #tpu.dimension_semantics<arbitrary>], iteration_bounds = array<i64: 2, 4>, scalar_prefetch = 0 : i64, scratch_operands = 0 : i64, tpu.core_type = #tpu.core_type<tc>, window_params = [{transform_indices = @transform_0, window_bounds = array<i64: 64, 32>}, {pipeline_mode = #tpu.pipeline_mode<synchronous>, transform_indices = @transform_1, window_bounds = array<i64: 4, 32, 256>}, {pipeline_mode = #tpu.pipeline_mode<synchronous>, transform_indices = @transform_2, window_bounds = array<i64: 128, 128>}, {pipeline_mode = #tpu.pipeline_mode<synchronous>, transform_indices = @transform_3, window_bounds = array<i64: 128, 128>}, {pipeline_mode = #tpu.pipeline_mode<synchronous>, transform_indices = @transform_4, window_bounds = array<i64: 1, 128>}, {transform_indices = @transform_5, window_bounds = array<i64: 8, 1, 8, 128>}]} {
    %c0 = arith.constant 0 : index
    %c0_0 = arith.constant 0 : index
    %0 = vector.load %arg2[%c0, %c0_0] : memref<64x32xf32, #tpu.memory_space<vmem>>, vector<64x32xf32>
    %1 = arith.truncf %0 : vector<64x32xf32> to vector<64x32xbf16>
    %2 = arith.index_cast %arg1 : i32 to index
    %c0_1 = arith.constant 0 : index
    %c0_2 = arith.constant 0 : index
    %3 = vector.load %arg3[%2, %c0_1, %c0_2] : memref<4x32x256xbf16, #tpu.memory_space<vmem>>, vector<1x32x256xbf16>
    %4 = vector.shape_cast %3 : vector<1x32x256xbf16> to vector<32x256xbf16>
    %cst = arith.constant dense<0.000000e+00> : vector<64x256xf32>
    %5 = tpu.matmul %1, %4, %cst {dimension_numbers = #tpu.dot_dimension_numbers<[1], [0], [0], [1], [0, 0, 1, 1], [], []>} : vector<64x32xbf16>, vector<32x256xbf16>, vector<64x256xf32> -> vector<64x256xf32>
    %6 = vector.extract_strided_slice %5 {offsets = [0, 0], sizes = [64, 128], strides = [1, 1]} : vector<64x256xf32> to vector<64x128xf32>
    %7 = vector.extract_strided_slice %5 {offsets = [0, 128], sizes = [64, 128], strides = [1, 1]} : vector<64x256xf32> to vector<64x128xf32>
    %8 = arith.mulf %7, %7 : vector<64x128xf32>
    %9 = arith.truncf %8 : vector<64x128xf32> to vector<64x128xbf16>
    %c0_3 = arith.constant 0 : index
    %c0_4 = arith.constant 0 : index
    %10 = vector.load %arg4[%c0_3, %c0_4] : memref<128x128xbf16, #tpu.memory_space<vmem>>, vector<128x128xbf16>
    %cst_5 = arith.constant dense<0.000000e+00> : vector<64x128xf32>
    %11 = tpu.matmul %9, %10, %cst_5 {dimension_numbers = #tpu.dot_dimension_numbers<[1], [0], [0], [1], [0, 0, 1, 1], [], []>} : vector<64x128xbf16>, vector<128x128xbf16>, vector<64x128xf32> -> vector<64x128xf32>
    %cst_6 = arith.constant 3.125000e-02 : f32
    %12 = vector.broadcast %cst_6 : f32 to vector<64x128xf32>
    %13 = arith.mulf %11, %12 : vector<64x128xf32>
    %14 = arith.mulf %6, %6 : vector<64x128xf32>
    %15 = arith.subf %13, %14 : vector<64x128xf32>
    %cst_7 = arith.constant 0.000000e+00 : f32
    %16 = vector.broadcast %cst_7 : f32 to vector<64x128xf32>
    %17 = arith.maximumf %15, %16 : vector<64x128xf32>
    %cst_8 = arith.constant 9.99999974E-6 : f32
    %18 = vector.broadcast %cst_8 : f32 to vector<64x128xf32>
    %19 = arith.addf %17, %18 : vector<64x128xf32>
    %20 = math.rsqrt %19 : vector<64x128xf32>
    %21 = arith.truncf %20 : vector<64x128xf32> to vector<64x128xbf16>
    %c0_9 = arith.constant 0 : index
    %c0_10 = arith.constant 0 : index
    %22 = vector.load %arg5[%c0_9, %c0_10] : memref<128x128xbf16, #tpu.memory_space<vmem>>, vector<128x128xbf16>
    %cst_11 = arith.constant dense<0.000000e+00> : vector<64x128xf32>
    %23 = tpu.matmul %21, %22, %cst_11 {dimension_numbers = #tpu.dot_dimension_numbers<[1], [0], [0], [1], [0, 0, 1, 1], [], []>} : vector<64x128xbf16>, vector<128x128xbf16>, vector<64x128xf32> -> vector<64x128xf32>
    %24 = arith.mulf %6, %20 : vector<64x128xf32>
    %25 = arith.truncf %24 : vector<64x128xf32> to vector<64x128xbf16>
    %c0_12 = arith.constant 0 : index
    %c0_13 = arith.constant 0 : index
    %26 = vector.load %arg5[%c0_12, %c0_13] : memref<128x128xbf16, #tpu.memory_space<vmem>>, vector<128x128xbf16>
    %cst_14 = arith.constant dense<0.000000e+00> : vector<64x128xf32>
    %27 = tpu.matmul %25, %26, %cst_14 {dimension_numbers = #tpu.dot_dimension_numbers<[1], [0], [0], [1], [0, 0, 1, 1], [], []>} : vector<64x128xbf16>, vector<128x128xbf16>, vector<64x128xf32> -> vector<64x128xf32>
    %28 = arith.mulf %7, %23 : vector<64x128xf32>
    %c0_15 = arith.constant 0 : index
    %c0_16 = arith.constant 0 : index
    %29 = vector.load %arg6[%c0_15, %c0_16] : memref<1x128xf32, #tpu.memory_space<vmem>>, vector<1x128xf32>
    %30 = vector.broadcast %29 : vector<1x128xf32> to vector<64x128xf32>
    %31 = arith.subf %30, %27 : vector<64x128xf32>
    %32 = arith.addf %28, %31 : vector<64x128xf32>
    %33 = vector.shape_cast %32 : vector<64x128xf32> to vector<8x8x128xf32>
    %c0_17 = arith.constant 0 : index
    %c0_18 = arith.constant 0 : index
    %c0_19 = arith.constant 0 : index
    %c0_20 = arith.constant 0 : index
    %34 = vector.load %arg7[%c0_17, %c0_18, %c0_19, %c0_20] : memref<8x1x8x128xf32, #tpu.memory_space<vmem>>, vector<8x1x8x128xf32>
    %35 = vector.shape_cast %34 : vector<8x1x8x128xf32> to vector<8x8x128xf32>
    %36 = vector.shape_cast %33 : vector<8x8x128xf32> to vector<8x1x8x128xf32>
    tpu.vector_store %arg7[%c0_17, %c0_18, %c0_19, %c0_20], %36 {strides = array<i32>} : memref<8x1x8x128xf32, #tpu.memory_space<vmem>>, vector<8x1x8x128xf32>,
    return
  }
  func.func @transform_0(%arg0: i32, %arg1: i32) -> (i32, i32) {
    %c0_i32 = arith.constant 0 : i32
    %c0_i32_0 = arith.constant 0 : i32
    return %arg0, %c0_i32 : i32, i32
  }
  func.func @transform_1(%arg0: i32, %arg1: i32) -> (i32, i32, i32) {
    %c0_i32 = arith.constant 0 : i32
    %c0_i32_0 = arith.constant 0 : i32
    %c0_i32_1 = arith.constant 0 : i32
    %c0_i32_2 = arith.constant 0 : i32
    return %c0_i32, %c0_i32_0, %c0_i32_1 : i32, i32, i32
  }
  func.func @transform_2(%arg0: i32, %arg1: i32) -> (i32, i32) {
    %c0_i32 = arith.constant 0 : i32
    %c0_i32_0 = arith.constant 0 : i32
    %c0_i32_1 = arith.constant 0 : i32
    return %c0_i32, %c0_i32_0 : i32, i32
  }
  func.func @transform_3(%arg0: i32, %arg1: i32) -> (i32, i32) {
    %c0_i32 = arith.constant 0 : i32
    %c0_i32_0 = arith.constant 0 : i32
    %c0_i32_1 = arith.constant 0 : i32
    return %c0_i32, %c0_i32_0 : i32, i32
  }
  func.func @transform_4(%arg0: i32, %arg1: i32) -> (i32, i32) {
    %c0_i32 = arith.constant 0 : i32
    %c0_i32_0 = arith.constant 0 : i32
    %c0_i32_1 = arith.constant 0 : i32
    return %c0_i32, %c0_i32_0 : i32, i32
  }
  func.func @transform_5(%arg0: i32, %arg1: i32) -> (i32, i32, i32, i32) {
    %c0_i32 = arith.constant 0 : i32
    %c0_i32_0 = arith.constant 0 : i32
    %c0_i32_1 = arith.constant 0 : i32
    return %arg0, %arg1, %c0_i32, %c0_i32_0 : i32, i32, i32, i32
  }
}

</mosaic_0001>

<llo_original>
// kernel: tpu_custom_call.1
$region0: #{tpu_custom_call.1}
  #allocation0 [shape = 'u32[]', space=smem, size = 0x4, offset = 0x4, fixed_abs, tag = 'smem constant byte address 0x4 - core index']
  #allocation1 [shape = 'u32[144,128]{1,0:T(1,128)}', space=vmem, size = 0x12000, scoped, tag = 'internal scratch']
  %s0 = inlined_call_operand.vmem [shape: f32[128,32], index: 0, kind: input, shape index: {}]
  %s1 = inlined_call_operand.vmem [shape: bf16[4,32,256], index: 1, kind: input, shape index: {}]
  %s2 = inlined_call_operand.hbm [shape: bf16[128,128], index: 2, kind: input, shape index: {}]
  %s3 = inlined_call_operand.hbm [shape: bf16[128,128], index: 3, kind: input, shape index: {}]
  %s4 = inlined_call_operand.vmem [shape: f32[1,128], index: 4, kind: input, shape index: {}]
  %s5 = inlined_call_operand.hbm [shape: f32[16,4,8,128], index: 5, kind: output, shape index: {}]
  %s6 = sld [smem:[#allocation0]]
  $region61: #{tpu_custom_call.1} parent=0
    _
  %s8 = ssub.s32 1, %s6
  %s9 = scalar_select 0, %s8, %s6
  $region1: #{tpu_custom_call.1} parent=0
    #allocation2 [shape = 'u8[32768]{0}', space=vmem, size = 0x8000, scoped, tag = 'input window, operand 2, single buffered']
    #allocation3 [shape = 's32[2]{0}', space=sflag, size = 0x8, scoped, tag = 'scoped memory for tpu_custom_call.1']
    #allocation4 [shape = 's32[2]{0}', space=sflag, size = 0x8, scoped, tag = 'scoped memory for tpu_custom_call.1']
    #allocation5 [shape = 'u8[32768]{0}', space=vmem, size = 0x8000, scoped, tag = 'input window, operand 3, single buffered']
    #allocation6 [shape = 's32[1]{0}', space=sflag, size = 0x4, scoped, tag = 'scoped memory for tpu_custom_call.1']
    #allocation7 [shape = 'u8[65536]{0}', space=vmem, size = 0x10000, scoped, tag = 'output window, operand 0']
    %10 = vsyncpa [#allocation3], 0
    %11 = vsyncpa [#allocation6], 0
    %12 = vsyncpa [#allocation4], 0
    %s13 = scalar_lea.sflag [#allocation4], 1
    %14 = vsyncpa %s13, 0
    loop: start=0, step=1, limit=10
    $region2: #{tpu_custom_call.1} parent=1 // loop_pre_header
      _
    $region3: #{tpu_custom_call.1} parent=1 // loop_header
      %s16 = sphi 0, %s20
      %p17 = scmp.ge.s32.totalorder %s16, 10
      %s23 = sphi 0, %s35
      %s24 = sphi 0, %s31
      %s25 = sphi 0, %s23
      %s26 = sphi 0, %s24
      %s27 = sphi 0, %s25
      %s28 = sphi 0, %s26
      %s38 = sphi 0, %s40
      %s41 = sphi 0, %s38
      %s42 = sphi 0, %s41
      %s58 = sphi 0, %s42
      %s62 = sphi 0, %s62
      %s64 = sphi 0, %s62
      %s65 = sphi 0, %s64
      %s79 = sphi 0, %s65
      %s83 = sphi 0, %s83
      %s85 = sphi 0, %s83
      %s86 = sphi 0, %s85
      %s100 = sphi 0, %s86
      %s104 = sphi 0, %s104
      %s106 = sphi 0, %s104
      %s107 = sphi 0, %s106
      %s121 = sphi 0, %s107
      %s125 = sphi 0, %s125
      %s127 = sphi 0, %s125
      %s128 = sphi 0, %s127
      %s142 = sphi 0, %s128
      %s150 = sphi 0, %s152
      %s153 = sphi 0, %s150
      %s154 = sphi 0, %s153
      %s170 = sphi 0, %s154
    $region4: #{tpu_custom_call.1} parent=1 // loop_header_branch
      %19 = sbr.rel (%p17) target = $region8
    $region5: #{tpu_custom_call.1} parent=1 // loop_body
      %s21 = ssub.s32 %s16, 1
      %s22 = ssub.s32 %s16, 2
      %s29 = sadd.s32 1, %s24
      %p30 = scmp.ge.s32.totalorder %s29, 4
      %s31 = scalar_select %p30, 0, %s29
      %s32 = sadd.s32 1, %s23
      %s33 = scalar_select %p30, %s32, %s23
      %p34 = scmp.ge.s32.totalorder %s33, 2
      %s35 = scalar_select %p34, 0, %s33
      %s36 = ssub.s32 %s23, %s35
      %p37 = scmp.eq.s32.totalorder %s36, 0
      %s39 = sadd.s32 %s38, 1
      %s40 = scalar_select %p37, %s38, %s39
      %p43 = pneg %p37
      %p44 = scmp.eq.s32.totalorder %s16, 7
      %p45 = por %p43, %p44
      %p46 = scmp.ne.s32.totalorder %s38, %s41
      %p47 = scmp.eq.s32.totalorder %s16, 0
      %p48 = por %p46, %p47
      %p49 = scmp.ne.s32.totalorder %s38, %s41
      %p50 = scmp.eq.s32.totalorder %s21, 7
      %p51 = por %p49, %p50
      %p52 = scmp.ne.s32.totalorder %s41, %s42
      %p53 = scmp.eq.s32.totalorder %s21, 0
      %p54 = por %p52, %p53
      %p55 = scmp.ne.s32.totalorder %s41, %s42
      %p56 = scmp.eq.s32.totalorder %s22, 7
      %p57 = por %p55, %p56
      %p59 = scmp.ne.s32.totalorder %s42, %s58
      %p60 = scmp.eq.s32.totalorder %s22, 0
      %p61 = por %p59, %p60
      %s63 = sadd.s32 %s62, 1
      %p66 = scmp.eq.s32.totalorder %s16, 7
      %p67 = scmp.ne.s32.totalorder %s62, %s64
      %p68 = scmp.eq.s32.totalorder %s16, 0
      %p69 = por %p67, %p68
      %p70 = scmp.ne.s32.totalorder %s62, %s64
      %p71 = scmp.eq.s32.totalorder %s21, 7
      %p72 = por %p70, %p71
      %p73 = scmp.ne.s32.totalorder %s64, %s65
      %p74 = scmp.eq.s32.totalorder %s21, 0
      %p75 = por %p73, %p74
      %p76 = scmp.ne.s32.totalorder %s64, %s65
      %p77 = scmp.eq.s32.totalorder %s22, 7
      %p78 = por %p76, %p77
      %p80 = scmp.ne.s32.totalorder %s65, %s79
      %p81 = scmp.eq.s32.totalorder %s22, 0
      %p82 = por %p80, %p81
      %s84 = sadd.s32 %s83, 1
      %p87 = scmp.eq.s32.totalorder %s16, 7
      %p88 = scmp.ne.s32.totalorder %s83, %s85
      %p89 = scmp.eq.s32.totalorder %s16, 0
      %p90 = por %p88, %p89
      %p91 = scmp.ne.s32.totalorder %s83, %s85
      %p92 = scmp.eq.s32.totalorder %s21, 7
      %p93 = por %p91, %p92
      %p94 = scmp.ne.s32.totalorder %s85, %s86
      %p95 = scmp.eq.s32.totalorder %s21, 0
      %p96 = por %p94, %p95
      %p97 = scmp.ne.s32.totalorder %s85, %s86
      %p98 = scmp.eq.s32.totalorder %s22, 7
      %p99 = por %p97, %p98
      %p101 = scmp.ne.s32.totalorder %s86, %s100
      %p102 = scmp.eq.s32.totalorder %s22, 0
      %p103 = por %p101, %p102
      %s105 = sadd.s32 %s104, 1
      %p108 = scmp.eq.s32.totalorder %s16, 7
      %p109 = scmp.ne.s32.totalorder %s104, %s106
      %p110 = scmp.eq.s32.totalorder %s16, 0
      %p111 = por %p109, %p110
      %p112 = scmp.ne.s32.totalorder %s104, %s106
      %p113 = scmp.eq.s32.totalorder %s21, 7
      %p114 = por %p112, %p113
      %p115 = scmp.ne.s32.totalorder %s106, %s107
      %p116 = scmp.eq.s32.totalorder %s21, 0
      %p117 = por %p115, %p116
      %p118 = scmp.ne.s32.totalorder %s106, %s107
      %p119 = scmp.eq.s32.totalorder %s22, 7
      %p120 = por %p118, %p119
      %p122 = scmp.ne.s32.totalorder %s107, %s121
      %p123 = scmp.eq.s32.totalorder %s22, 0
      %p124 = por %p122, %p123
      %s126 = sadd.s32 %s125, 1
      %p129 = scmp.eq.s32.totalorder %s16, 7
      %p130 = scmp.ne.s32.totalorder %s125, %s127
      %p131 = scmp.eq.s32.totalorder %s16, 0
      %p132 = por %p130, %p131
      %p133 = scmp.ne.s32.totalorder %s125, %s127
      %p134 = scmp.eq.s32.totalorder %s21, 7
      %p135 = por %p133, %p134
      %p136 = scmp.ne.s32.totalorder %s127, %s128
      %p137 = scmp.eq.s32.totalorder %s21, 0
      %p138 = por %p136, %p137
      %p139 = scmp.ne.s32.totalorder %s127, %s128
      %p140 = scmp.eq.s32.totalorder %s22, 7
      %p141 = por %p139, %p140
      %p143 = scmp.ne.s32.totalorder %s128, %s142
      %p144 = scmp.eq.s32.totalorder %s22, 0
      %p145 = por %p143, %p144
      %s146 = ssub.s32 %s23, %s35
      %s147 = ssub.s32 %s24, %s31
      %s148 = sor.u32 %s146, %s147
      %p149 = scmp.eq.s32.totalorder %s148, 0
      %s151 = sadd.s32 %s150, 1
      %s152 = scalar_select %p149, %s150, %s151
      %p155 = pneg %p149
      %p156 = scmp.eq.s32.totalorder %s16, 7
      %p157 = por %p155, %p156
      %p158 = scmp.ne.s32.totalorder %s150, %s153
      %p159 = scmp.eq.s32.totalorder %s16, 0
      %p160 = por %p158, %p159
      %p161 = scmp.ne.s32.totalorder %s150, %s153
      %p162 = scmp.eq.s32.totalorder %s21, 7
      %p163 = por %p161, %p162
      %p164 = scmp.ne.s32.totalorder %s153, %s154
      %p165 = scmp.eq.s32.totalorder %s21, 0
      %p166 = por %p164, %p165
      %p167 = scmp.ne.s32.totalorder %s153, %s154
      %p168 = scmp.eq.s32.totalorder %s22, 7
      %p169 = por %p167, %p168
      %p171 = scmp.ne.s32.totalorder %s154, %s170
      %p172 = scmp.eq.s32.totalorder %s22, 0
      %p173 = por %p171, %p172
      %p174 = scmp.le.s32.totalorder 1, %s16
      %p175 = scmp.lt.s32.totalorder %s16, 9
      %p176 = pnand %p174, %p175
      %p177 = pneg %p176
      // Predicated region
      $region9: #{tpu_custom_call.1} parent=5 // pred_check
        _
      $region10: #{tpu_custom_call.1} parent=5 // pred_check_branch
        %179 = sbr.rel (%p176) target = $region12
      $region11: #{tpu_custom_call.1} parent=5 // pred_region
        %s180 = ssub.s32 %s16, 1
        // Predicated region
        $region13: #{tpu_custom_call.1} parent=11 // pred_check
          %p181 = pneg %p75
        $region14: #{tpu_custom_call.1} parent=11 // pred_check_branch
          %183 = sbr.rel (%p181) target = $region16
        $region15: #{tpu_custom_call.1} parent=11 // pred_region
          _
        $region16: #{tpu_custom_call.1} parent=11 // pred_fallthru
          _
        // Predicated region
        $region17: #{tpu_custom_call.1} parent=11 // pred_check
          %p184 = pneg %p96
        $region18: #{tpu_custom_call.1} parent=11 // pred_check_branch
          %186 = sbr.rel (%p184) target = $region20
        $region19: #{tpu_custom_call.1} parent=11 // pred_region
          %s188 = ssub.s32 1024, 1024
          %189 = vsyncadd [#allocation3], %s188
          %s190 = sshll.u32 [#allocation2], 4
          %s191 = int_to_ptr.vmem [resolvable:$true] %s190
          %196 = dma.hbm_to_vmem [thread:$0]  %s2, 1024, %s191, [#allocation3], 64, 64, 4
        $region20: #{tpu_custom_call.1} parent=11 // pred_fallthru
          _
        // Predicated region
        $region21: #{tpu_custom_call.1} parent=11 // pred_check
          %p197 = pneg %p117
        $region22: #{tpu_custom_call.1} parent=11 // pred_check_branch
          %199 = sbr.rel (%p197) target = $region24
        $region23: #{tpu_custom_call.1} parent=11 // pred_region
          %s201 = ssub.s32 1024, 1024
          %202 = vsyncadd [#allocation6], %s201
          %s203 = sshll.u32 [#allocation5], 4
          %s204 = int_to_ptr.vmem [resolvable:$true] %s203
          %209 = dma.hbm_to_vmem [thread:$0]  %s3, 1024, %s204, [#allocation6], 64, 64, 4
        $region24: #{tpu_custom_call.1} parent=11 // pred_fallthru
          _
        // Predicated region
        $region25: #{tpu_custom_call.1} parent=11 // pred_check
          %p210 = pneg %p138
        $region26: #{tpu_custom_call.1} parent=11 // pred_check_branch
          %212 = sbr.rel (%p210) target = $region28
        $region27: #{tpu_custom_call.1} parent=11 // pred_region
          _
        $region28: #{tpu_custom_call.1} parent=11 // pred_fallthru
          _
      $region12: #{tpu_custom_call.1} parent=5 // pred_fallthru
        _
      %p213 = scmp.lt.s32.totalorder %s16, 8
      // Predicated region
      $region29: #{tpu_custom_call.1} parent=5 // pred_check
        %p214 = pneg %p213
      $region30: #{tpu_custom_call.1} parent=5 // pred_check_branch
        %216 = sbr.rel (%p214) target = $region32
      $region31: #{tpu_custom_call.1} parent=5 // pred_region
        // Predicated region
        $region33: #{tpu_custom_call.1} parent=31 // pred_check
          %p217 = pneg %p48
        $region34: #{tpu_custom_call.1} parent=31 // pred_check_branch
          %219 = sbr.rel (%p217) target = $region36
        $region35: #{tpu_custom_call.1} parent=31 // pred_region
          %s220 = smul.u32 8, %s23
          %p221 = scmp.lt.s32.totalorder %s220, 15
          %s222 = scalar_select %p221, %s220, 15
          %s223 = smul.addr %s222, 8
          %s224 = scalar_lea.vmem %s0, %s223
          %s225 = smul.u32 8, %s23
        $region36: #{tpu_custom_call.1} parent=31 // pred_fallthru
          _
      $region32: #{tpu_custom_call.1} parent=5 // pred_fallthru
        _
      %p226 = scmp.le.s32.totalorder 1, %s16
      %p227 = scmp.lt.s32.totalorder %s16, 9
      %p228 = pnand %p226, %p227
      %p229 = pneg %p228
      // Predicated region
      $region37: #{tpu_custom_call.1} parent=5 // pred_check
        _
      $region38: #{tpu_custom_call.1} parent=5 // pred_check_branch
        %231 = sbr.rel (%p228) target = $region40
      $region39: #{tpu_custom_call.1} parent=5 // pred_region
        %s232 = ssub.s32 %s16, 1
        // Predicated region
        $region41: #{tpu_custom_call.1} parent=39 // pred_check
          %p233 = pneg %p96
        $region42: #{tpu_custom_call.1} parent=39 // pred_check_branch
          %235 = sbr.rel (%p233) target = $region44
        $region43: #{tpu_custom_call.1} parent=39 // pred_region
          %236 = dma.done [#allocation3], 1024
        $region44: #{tpu_custom_call.1} parent=39 // pred_fallthru
          _
        // Predicated region
        $region45: #{tpu_custom_call.1} parent=39 // pred_check
          %p237 = pneg %p117
        $region46: #{tpu_custom_call.1} parent=39 // pred_check_branch
          %239 = sbr.rel (%p237) target = $region48
        $region47: #{tpu_custom_call.1} parent=39 // pred_region
          %240 = dma.done [#allocation6], 1024
        $region48: #{tpu_custom_call.1} parent=39 // pred_fallthru
          _
        %s241 = smul.u32 8, %s25
        %p242 = scmp.lt.s32.totalorder %s241, 15
        %s243 = scalar_select %p242, %s241, 15
        %s244 = smul.addr %s243, 8
        %s245 = scalar_lea.vmem %s0, %s244
        %p246 = pneg %p54
        %p247 = pneg %p51
        %p248 = pneg %p75
        %p249 = pneg %p72
        %p250 = pneg %p96
        %p251 = pneg %p93
        %p252 = pneg %p117
        %p253 = pneg %p114
        %p254 = pneg %p138
        %p255 = pneg %p135
        %p256 = pneg %p166
        %p257 = pneg %p163
        %s258 = sand.u32 %s153, 1
        %s259 = scalar_lea.sflag [#allocation4], %s258
        %s260 = sand.u32 %s153, 1
        %s261 = smul.addr %s260, 64
        %s262 = scalar_lea.vmem [#allocation7], %s261
        %s263 = smul.u32 8, %s25
        %p264 = scmp.lt.s32.totalorder %s263, 15
        %s265 = scalar_select %p264, %s263, 15
        %s266 = smul.addr %s265, 8
        %s267 = scalar_lea.vmem %s0, %s266
        %s268 = smul.u32 8, %s25
        %s269 = smul.u32 8, %s25
        %v271 = vld [vmem:[%s267] sm:$0xff]
        %v272 = vld [vmem:[%s267 + $0x8] sm:$0xff]
        %v273 = vld [vmem:[%s267 + $0x10] sm:$0xff]
        %v274 = vld [vmem:[%s267 + $0x18] sm:$0xff]
        %v275 = vld [vmem:[%s267 + $0x20] sm:$0xff]
        %v276 = vld [vmem:[%s267 + $0x28] sm:$0xff]
        %v277 = vld [vmem:[%s267 + $0x30] sm:$0xff]
        %v278 = vld [vmem:[%s267 + $0x38] sm:$0xff]
        %v279 = vpack.c.bf16 %v272, %v271
        %v280 = vpack.c.bf16 %v274, %v273
        %v281 = vpack.c.bf16 %v276, %v275
        %v282 = vpack.c.bf16 %v278, %v277
        %s283 = smul.u32 %s26, 8
        %s284 = smul.addr %s283, 4
        %s285 = scalar_lea.vmem %s1, %s284
        %v286 = vld [vmem:[%s285] sm:$0xff]
        %v287 = vld [vmem:[%s285 + $0x8] sm:$0xff]
        %v288 = vld [vmem:[%s285 + $0x10] sm:$0xff]
        %v289 = vld [vmem:[%s285 + $0x18] sm:$0xff]
        %v294 = vunpack.c.l.b16 %v286
        %v295 = vunpack.c.h.b16 %v286
        %v296 = vunpack.c.l.b16 %v287
        %v297 = vunpack.c.h.b16 %v287
        %v298 = vunpack.c.l.b16 %v288
        %v299 = vunpack.c.h.b16 %v288
        %v300 = vunpack.c.l.b16 %v289
        %v301 = vunpack.c.h.b16 %v289
        %v302 = vpack.c.b16 %v296, %v294
        %v303 = vpack.c.b16 %v297, %v295
        %v304 = vpack.c.b16 %v300, %v298
        %v305 = vpack.c.b16 %v301, %v299
        %vm310 = vcmask 261120
        %v312 = vsel %vm310, %v279, 0
        %v315 = vsel %vm310, %v280, 0
        %v318 = vsel %vm310, %v281, 0
        %v321 = vsel %vm310, %v282, 0
        %323 = vmatprep.subr.bf16.mxu0 %v303
        %324 = vmatpush1.bf16.msra.mxu0 %v302
        %325 = vmatprep.subr.bf16.mxu0 %v305
        %326 = vmatpush1.bf16.msra.mxu0 %v304
        %327 = vmatprep.subr.bf16.mxu0 0
        %328 = vmatpush1.bf16.msra.mxu0 0
        %329 = vmatprep.subr.bf16.mxu0 0
        %330 = vmatpush1.bf16.msra.mxu0 0
        %331 = vmatprep.subr.bf16.mxu0 0
        %332 = vmatpush1.bf16.msra.mxu0 0
        %333 = vmatprep.subr.bf16.mxu0 0
        %334 = vmatpush1.bf16.msra.mxu0 0
        %335 = vmatprep.subr.bf16.mxu0 0
        %336 = vmatpush1.bf16.msra.mxu0 0
        %337 = vmatprep.subr.bf16.mxu0 0
        %338 = vmatpush1.bf16.msra.mxu0 0
        %339 = vmatprep.subr.bf16.mxu0 0
        %340 = vmatpush1.bf16.msra.mxu0 0
        %341 = vmatprep.subr.bf16.mxu0 0
        %342 = vmatpush1.bf16.msra.mxu0 0
        %343 = vmatprep.subr.bf16.mxu0 0
        %344 = vmatpush1.bf16.msra.mxu0 0
        %345 = vmatprep.subr.bf16.mxu0 0
        %346 = vmatpush1.bf16.msra.mxu0 0
        %347 = vmatprep.subr.bf16.mxu0 0
        %348 = vmatpush1.bf16.msra.mxu0 0
        %349 = vmatprep.subr.bf16.mxu0 0
        %350 = vmatpush1.bf16.msra.mxu0 0
        %351 = vmatprep.subr.bf16.mxu0 0
        %352 = vmatpush1.bf16.msra.mxu0 0
        %353 = vmatprep.subr.bf16.mxu0 0
        %354 = vmatpush1.bf16.msra.mxu0 0
        %355 = vmatprep.mubr.bf16.mxu0 0
        %356 = vmatmul.mubr.bf16.gmra.mrb[0].mxu0 %v312
        %v357 = vpop.f32.mrb[0].mxu0
        %v358 = vadd.f32 0.0, %v357
        %v359 = vpop.f32.mrb[0].mxu0
        %v360 = vadd.f32 0.0, %v359
        %v361 = vpop.f32.mrb[0].mxu0
        %v362 = vadd.f32 0.0, %v361
        %v363 = vpop.f32.mrb[0].mxu0
        %v364 = vadd.f32 0.0, %v363
        %365 = vmatprep.mubr.bf16.mxu0 0
        %366 = vmatmul.mubr.bf16.gmra.mrb[0].mxu0 %v315
        %v367 = vpop.f32.mrb[0].mxu0
        %v368 = vadd.f32 0.0, %v367
        %v369 = vpop.f32.mrb[0].mxu0
        %v370 = vadd.f32 0.0, %v369
        %v371 = vpop.f32.mrb[0].mxu0
        %v372 = vadd.f32 0.0, %v371
        %v373 = vpop.f32.mrb[0].mxu0
        %v374 = vadd.f32 0.0, %v373
        %375 = vmatprep.mubr.bf16.mxu0 0
        %376 = vmatmul.mubr.bf16.gmra.mrb[0].mxu0 %v318
        %v377 = vpop.f32.mrb[0].mxu0
        %v378 = vadd.f32 0.0, %v377
        %v379 = vpop.f32.mrb[0].mxu0
        %v380 = vadd.f32 0.0, %v379
        %v381 = vpop.f32.mrb[0].mxu0
        %v382 = vadd.f32 0.0, %v381
        %v383 = vpop.f32.mrb[0].mxu0
        %v384 = vadd.f32 0.0, %v383
        %385 = vmatprep.mubr.bf16.mxu0 0
        %386 = vmatmul.mubr.bf16.gmra.mrb[0].mxu0 %v321
        %v387 = vpop.f32.mrb[0].mxu0
        %v388 = vadd.f32 0.0, %v387
        %v389 = vpop.f32.mrb[0].mxu0
        %v390 = vadd.f32 0.0, %v389
        %v391 = vpop.f32.mrb[0].mxu0
        %v392 = vadd.f32 0.0, %v391
        %v393 = vpop.f32.mrb[0].mxu0
        %v394 = vadd.f32 0.0, %v393
        %395 = vdwg.mxu0
        %v396 = vmul.f32 %v360, %v360
        %v397 = vmul.f32 %v364, %v364
        %v398 = vmul.f32 %v370, %v370
        %v399 = vmul.f32 %v374, %v374
        %v400 = vmul.f32 %v380, %v380
        %v401 = vmul.f32 %v384, %v384
        %v402 = vmul.f32 %v390, %v390
        %v403 = vmul.f32 %v394, %v394
        %v404 = vpack.c.bf16 %v397, %v396
        %v405 = vpack.c.bf16 %v399, %v398
        %v406 = vpack.c.bf16 %v401, %v400
        %v407 = vpack.c.bf16 %v403, %v402
        %v408 = vld [vmem:[#allocation2] sm:$0xf]
        %v409 = vld [vmem:[#allocation2 + $0x4] sm:$0xf]
        %v410 = vld [vmem:[#allocation2 + $0x8] sm:$0xf]
        %v411 = vld [vmem:[#allocation2 + $0xc] sm:$0xf]
        %v412 = vld [vmem:[#allocation2 + $0x10] sm:$0xf]
        %v413 = vld [vmem:[#allocation2 + $0x14] sm:$0xf]
        %v414 = vld [vmem:[#allocation2 + $0x18] sm:$0xf]
        %v415 = vld [vmem:[#allocation2 + $0x1c] sm:$0xf]
        %v416 = vld [vmem:[#allocation2 + $0x20] sm:$0xf]
        %v417 = vld [vmem:[#allocation2 + $0x24] sm:$0xf]
        %v418 = vld [vmem:[#allocation2 + $0x28] sm:$0xf]
        %v419 = vld [vmem:[#allocation2 + $0x2c] sm:$0xf]
        %v420 = vld [vmem:[#allocation2 + $0x30] sm:$0xf]
        %v421 = vld [vmem:[#allocation2 + $0x34] sm:$0xf]
        %v422 = vld [vmem:[#allocation2 + $0x38] sm:$0xf]
        %v423 = vld [vmem:[#allocation2 + $0x3c] sm:$0xf]
        %v440 = vunpack.c.l.b16 %v408
        %v441 = vunpack.c.l.b16 %v409
        %v442 = vunpack.c.l.b16 %v410
        %v443 = vunpack.c.l.b16 %v411
        %v444 = vunpack.c.l.b16 %v412
        %v445 = vunpack.c.l.b16 %v413
        %v446 = vunpack.c.l.b16 %v414
        %v447 = vunpack.c.l.b16 %v415
        %v448 = vunpack.c.l.b16 %v416
        %v449 = vunpack.c.l.b16 %v417
        %v450 = vunpack.c.l.b16 %v418
        %v451 = vunpack.c.l.b16 %v419
        %v452 = vunpack.c.l.b16 %v420
        %v453 = vunpack.c.l.b16 %v421
        %v454 = vunpack.c.l.b16 %v422
        %v455 = vunpack.c.l.b16 %v423
        %v456 = vpack.c.b16 %v441, %v440
        %v457 = vpack.c.b16 %v443, %v442
        %v458 = vpack.c.b16 %v445, %v444
        %v459 = vpack.c.b16 %v447, %v446
        %v460 = vpack.c.b16 %v449, %v448
        %v461 = vpack.c.b16 %v451, %v450
        %v462 = vpack.c.b16 %v453, %v452
        %v463 = vpack.c.b16 %v455, %v454
        %472 = vmatprep.subr.bf16.mxu0 0
        %473 = vmatpush1.bf16.msra.mxu0 %v456
        %474 = vmatprep.subr.bf16.mxu0 0
        %475 = vmatpush1.bf16.msra.mxu0 %v457
        %476 = vmatprep.subr.bf16.mxu0 0
        %477 = vmatpush1.bf16.msra.mxu0 %v458
        %478 = vmatprep.subr.bf16.mxu0 0
        %479 = vmatpush1.bf16.msra.mxu0 %v459
        %480 = vmatprep.subr.bf16.mxu0 0
        %481 = vmatpush1.bf16.msra.mxu0 %v460
        %482 = vmatprep.subr.bf16.mxu0 0
        %483 = vmatpush1.bf16.msra.mxu0 %v461
        %484 = vmatprep.subr.bf16.mxu0 0
        %485 = vmatpush1.bf16.msra.mxu0 %v462
        %486 = vmatprep.subr.bf16.mxu0 0
        %487 = vmatpush1.bf16.msra.mxu0 %v463
        %488 = vmatprep.subr.bf16.mxu0 0
        %489 = vmatpush1.bf16.msra.mxu0 0
        %490 = vmatprep.subr.bf16.mxu0 0
        %491 = vmatpush1.bf16.msra.mxu0 0
        %492 = vmatprep.subr.bf16.mxu0 0
        %493 = vmatpush1.bf16.msra.mxu0 0
        %494 = vmatprep.subr.bf16.mxu0 0
        %495 = vmatpush1.bf16.msra.mxu0 0
        %496 = vmatprep.subr.bf16.mxu0 0
        %497 = vmatpush1.bf16.msra.mxu0 0
        %498 = vmatprep.subr.bf16.mxu0 0
        %499 = vmatpush1.bf16.msra.mxu0 0
        %500 = vmatprep.subr.bf16.mxu0 0
        %501 = vmatpush1.bf16.msra.mxu0 0
        %502 = vmatprep.subr.bf16.mxu0 0
        %503 = vmatpush1.bf16.msra.mxu0 0
        %504 = vmatprep.mubr.bf16.mxu0 0
        %505 = vmatmul.mubr.bf16.gmra.mrb[0].mxu0 %v404
        %v506 = vpop.f32.mrb[0].mxu0
        %v507 = vadd.f32 0.0, %v506
        %v508 = vpop.f32.mrb[0].mxu0
        %v509 = vpop.f32.mrb[0].mxu0
        %v510 = vadd.f32 0.0, %v509
        %v511 = vpop.f32.mrb[0].mxu0
        %512 = vmatprep.mubr.bf16.mxu0 0
        %513 = vmatmul.mubr.bf16.gmra.mrb[0].mxu0 %v405
        %v514 = vpop.f32.mrb[0].mxu0
        %v515 = vadd.f32 0.0, %v514
        %v516 = vpop.f32.mrb[0].mxu0
        %v517 = vpop.f32.mrb[0].mxu0
        %v518 = vadd.f32 0.0, %v517
        %v519 = vpop.f32.mrb[0].mxu0
        %520 = vmatprep.mubr.bf16.mxu0 0
        %521 = vmatmul.mubr.bf16.gmra.mrb[0].mxu0 %v406
        %v522 = vpop.f32.mrb[0].mxu0
        %v523 = vadd.f32 0.0, %v522
        %v524 = vpop.f32.mrb[0].mxu0
        %v525 = vpop.f32.mrb[0].mxu0
        %v526 = vadd.f32 0.0, %v525
        %v527 = vpop.f32.mrb[0].mxu0
        %528 = vmatprep.mubr.bf16.mxu0 0
        %529 = vmatmul.mubr.bf16.gmra.mrb[0].mxu0 %v407
        %v530 = vpop.f32.mrb[0].mxu0
        %v531 = vadd.f32 0.0, %v530
        %v532 = vpop.f32.mrb[0].mxu0
        %v533 = vpop.f32.mrb[0].mxu0
        %v534 = vadd.f32 0.0, %v533
        %v535 = vpop.f32.mrb[0].mxu0
        %536 = vdwg.mxu0
        %v537 = vmul.f32 %v507, 0.03125
        %v538 = vmul.f32 %v510, 0.03125
        %v539 = vmul.f32 %v515, 0.03125
        %v540 = vmul.f32 %v518, 0.03125
        %v541 = vmul.f32 %v523, 0.03125
        %v542 = vmul.f32 %v526, 0.03125
        %v543 = vmul.f32 %v531, 0.03125
        %v544 = vmul.f32 %v534, 0.03125
        %v545 = vmul.f32 %v358, %v358
        %v546 = vmul.f32 %v362, %v362
        %v547 = vmul.f32 %v368, %v368
        %v548 = vmul.f32 %v372, %v372
        %v549 = vmul.f32 %v378, %v378
        %v550 = vmul.f32 %v382, %v382
        %v551 = vmul.f32 %v388, %v388
        %v552 = vmul.f32 %v392, %v392
        %v553 = vsub.f32 %v537, %v545
        %v554 = vsub.f32 %v538, %v546
        %v555 = vsub.f32 %v539, %v547
        %v556 = vsub.f32 %v540, %v548
        %v557 = vsub.f32 %v541, %v549
        %v558 = vsub.f32 %v542, %v550
        %v559 = vsub.f32 %v543, %v551
        %v560 = vsub.f32 %v544, %v552
        %v561 = vmax.f32 %v553, 0.0
        %v562 = vmax.f32 %v554, 0.0
        %v563 = vmax.f32 %v555, 0.0
        %v564 = vmax.f32 %v556, 0.0
        %v565 = vmax.f32 %v557, 0.0
        %v566 = vmax.f32 %v558, 0.0
        %v567 = vmax.f32 %v559, 0.0
        %v568 = vmax.f32 %v560, 0.0
        %v569 = vadd.f32 %v561, 1e-05
        %v570 = vadd.f32 %v562, 1e-05
        %v571 = vadd.f32 %v563, 1e-05
        %v572 = vadd.f32 %v564, 1e-05
        %v573 = vadd.f32 %v565, 1e-05
        %v574 = vadd.f32 %v566, 1e-05
        %v575 = vadd.f32 %v567, 1e-05
        %v576 = vadd.f32 %v568, 1e-05
        %v577 = vrsqrt.pop %v569
        %v578 = vrsqrt.pop %v570
        %v579 = vrsqrt.pop %v571
        %v580 = vrsqrt.pop %v572
        %v581 = vrsqrt.pop %v573
        %v582 = vrsqrt.pop %v574
        %v583 = vrsqrt.pop %v575
        %v584 = vrsqrt.pop %v576
        %v585 = vpack.c.bf16 %v578, %v577
        %v586 = vpack.c.bf16 %v580, %v579
        %v587 = vpack.c.bf16 %v582, %v581
        %v588 = vpack.c.bf16 %v584, %v583
        %v589 = vld [vmem:[#allocation5] sm:$0xf]
        %v590 = vld [vmem:[#allocation5 + $0x4] sm:$0xf]
        %v591 = vld [vmem:[#allocation5 + $0x8] sm:$0xf]
        %v592 = vld [vmem:[#allocation5 + $0xc] sm:$0xf]
        %v593 = vld [vmem:[#allocation5 + $0x10] sm:$0xf]
        %v594 = vld [vmem:[#allocation5 + $0x14] sm:$0xf]
        %v595 = vld [vmem:[#allocation5 + $0x18] sm:$0xf]
        %v596 = vld [vmem:[#allocation5 + $0x1c] sm:$0xf]
        %v597 = vld [vmem:[#allocation5 + $0x20] sm:$0xf]
        %v598 = vld [vmem:[#allocation5 + $0x24] sm:$0xf]
        %v599 = vld [vmem:[#allocation5 + $0x28] sm:$0xf]
        %v600 = vld [vmem:[#allocation5 + $0x2c] sm:$0xf]
        %v601 = vld [vmem:[#allocation5 + $0x30] sm:$0xf]
        %v602 = vld [vmem:[#allocation5 + $0x34] sm:$0xf]
        %v603 = vld [vmem:[#allocation5 + $0x38] sm:$0xf]
        %v604 = vld [vmem:[#allocation5 + $0x3c] sm:$0xf]
        %v621 = vunpack.c.l.b16 %v589
        %v622 = vunpack.c.l.b16 %v590
        %v623 = vunpack.c.l.b16 %v591
        %v624 = vunpack.c.l.b16 %v592
        %v625 = vunpack.c.l.b16 %v593
        %v626 = vunpack.c.l.b16 %v594
        %v627 = vunpack.c.l.b16 %v595
        %v628 = vunpack.c.l.b16 %v596
        %v629 = vunpack.c.l.b16 %v597
        %v630 = vunpack.c.l.b16 %v598
        %v631 = vunpack.c.l.b16 %v599
        %v632 = vunpack.c.l.b16 %v600
        %v633 = vunpack.c.l.b16 %v601
        %v634 = vunpack.c.l.b16 %v602
        %v635 = vunpack.c.l.b16 %v603
        %v636 = vunpack.c.l.b16 %v604
        %v637 = vpack.c.b16 %v622, %v621
        %v638 = vpack.c.b16 %v624, %v623
        %v639 = vpack.c.b16 %v626, %v625
        %v640 = vpack.c.b16 %v628, %v627
        %v641 = vpack.c.b16 %v630, %v629
        %v642 = vpack.c.b16 %v632, %v631
        %v643 = vpack.c.b16 %v634, %v633
        %v644 = vpack.c.b16 %v636, %v635
        %653 = vmatprep.subr.bf16.mxu0 0
        %654 = vmatpush1.bf16.msra.mxu0 %v637
        %655 = vmatprep.subr.bf16.mxu0 0
        %656 = vmatpush1.bf16.msra.mxu0 %v638
        %657 = vmatprep.subr.bf16.mxu0 0
        %658 = vmatpush1.bf16.msra.mxu0 %v639
        %659 = vmatprep.subr.bf16.mxu0 0
        %660 = vmatpush1.bf16.msra.mxu0 %v640
        %661 = vmatprep.subr.bf16.mxu0 0
        %662 = vmatpush1.bf16.msra.mxu0 %v641
        %663 = vmatprep.subr.bf16.mxu0 0
        %664 = vmatpush1.bf16.msra.mxu0 %v642
        %665 = vmatprep.subr.bf16.mxu0 0
        %666 = vmatpush1.bf16.msra.mxu0 %v643
        %667 = vmatprep.subr.bf16.mxu0 0
        %668 = vmatpush1.bf16.msra.mxu0 %v644
        %669 = vmatprep.subr.bf16.mxu0 0
        %670 = vmatpush1.bf16.msra.mxu0 0
        %671 = vmatprep.subr.bf16.mxu0 0
        %672 = vmatpush1.bf16.msra.mxu0 0
        %673 = vmatprep.subr.bf16.mxu0 0
        %674 = vmatpush1.bf16.msra.mxu0 0
        %675 = vmatprep.subr.bf16.mxu0 0
        %676 = vmatpush1.bf16.msra.mxu0 0
        %677 = vmatprep.subr.bf16.mxu0 0
        %678 = vmatpush1.bf16.msra.mxu0 0
        %679 = vmatprep.subr.bf16.mxu0 0
        %680 = vmatpush1.bf16.msra.mxu0 0
        %681 = vmatprep.subr.bf16.mxu0 0
        %682 = vmatpush1.bf16.msra.mxu0 0
        %683 = vmatprep.subr.bf16.mxu0 0
        %684 = vmatpush1.bf16.msra.mxu0 0
        %685 = vmatprep.mubr.bf16.mxu0 0
        %686 = vmatmul.mubr.bf16.gmra.mrb[0].mxu0 %v585
        %v687 = vpop.f32.mrb[0].mxu0
        %v688 = vadd.f32 0.0, %v687
        %v689 = vpop.f32.mrb[0].mxu0
        %v690 = vpop.f32.mrb[0].mxu0
        %v691 = vadd.f32 0.0, %v690
        %v692 = vpop.f32.mrb[0].mxu0
        %693 = vmatprep.mubr.bf16.mxu0 0
        %694 = vmatmul.mubr.bf16.gmra.mrb[0].mxu0 %v586
        %v695 = vpop.f32.mrb[0].mxu0
        %v696 = vadd.f32 0.0, %v695
        %v697 = vpop.f32.mrb[0].mxu0
        %v698 = vpop.f32.mrb[0].mxu0
        %v699 = vadd.f32 0.0, %v698
        %v700 = vpop.f32.mrb[0].mxu0
        %701 = vmatprep.mubr.bf16.mxu0 0
        %702 = vmatmul.mubr.bf16.gmra.mrb[0].mxu0 %v587
        %v703 = vpop.f32.mrb[0].mxu0
        %v704 = vadd.f32 0.0, %v703
        %v705 = vpop.f32.mrb[0].mxu0
        %v706 = vpop.f32.mrb[0].mxu0
        %v707 = vadd.f32 0.0, %v706
        %v708 = vpop.f32.mrb[0].mxu0
        %709 = vmatprep.mubr.bf16.mxu0 0
        %710 = vmatmul.mubr.bf16.gmra.mrb[0].mxu0 %v588
        %v711 = vpop.f32.mrb[0].mxu0
        %v712 = vadd.f32 0.0, %v711
        %v713 = vpop.f32.mrb[0].mxu0
        %v714 = vpop.f32.mrb[0].mxu0
        %v715 = vadd.f32 0.0, %v714
        %v716 = vpop.f32.mrb[0].mxu0
        %717 = vdwg.mxu0
        %v718 = vmul.f32 %v358, %v577
        %v719 = vmul.f32 %v362, %v578
        %v720 = vmul.f32 %v368, %v579
        %v721 = vmul.f32 %v372, %v580
        %v722 = vmul.f32 %v378, %v581
        %v723 = vmul.f32 %v382, %v582
        %v724 = vmul.f32 %v388, %v583
        %v725 = vmul.f32 %v392, %v584
        %v726 = vpack.c.bf16 %v719, %v718
        %v727 = vpack.c.bf16 %v721, %v720
        %v728 = vpack.c.bf16 %v723, %v722
        %v729 = vpack.c.bf16 %v725, %v724
        %730 = vmatprep.subr.bf16.mxu0 0
        %731 = vmatpush1.bf16.msra.mxu0 %v637
        %732 = vmatprep.subr.bf16.mxu0 0
        %733 = vmatpush1.bf16.msra.mxu0 %v638
        %734 = vmatprep.subr.bf16.mxu0 0
        %735 = vmatpush1.bf16.msra.mxu0 %v639
        %736 = vmatprep.subr.bf16.mxu0 0
        %737 = vmatpush1.bf16.msra.mxu0 %v640
        %738 = vmatprep.subr.bf16.mxu0 0
        %739 = vmatpush1.bf16.msra.mxu0 %v641
        %740 = vmatprep.subr.bf16.mxu0 0
        %741 = vmatpush1.bf16.msra.mxu0 %v642
        %742 = vmatprep.subr.bf16.mxu0 0
        %743 = vmatpush1.bf16.msra.mxu0 %v643
        %744 = vmatprep.subr.bf16.mxu0 0
        %745 = vmatpush1.bf16.msra.mxu0 %v644
        %746 = vmatprep.subr.bf16.mxu0 0
        %747 = vmatpush1.bf16.msra.mxu0 0
        %748 = vmatprep.subr.bf16.mxu0 0
        %749 = vmatpush1.bf16.msra.mxu0 0
        %750 = vmatprep.subr.bf16.mxu0 0
        %751 = vmatpush1.bf16.msra.mxu0 0
        %752 = vmatprep.subr.bf16.mxu0 0
        %753 = vmatpush1.bf16.msra.mxu0 0
        %754 = vmatprep.subr.bf16.mxu0 0
        %755 = vmatpush1.bf16.msra.mxu0 0
        %756 = vmatprep.subr.bf16.mxu0 0
        %757 = vmatpush1.bf16.msra.mxu0 0
        %758 = vmatprep.subr.bf16.mxu0 0
        %759 = vmatpush1.bf16.msra.mxu0 0
        %760 = vmatprep.subr.bf16.mxu0 0
        %761 = vmatpush1.bf16.msra.mxu0 0
        %762 = vmatprep.mubr.bf16.mxu0 0
        %763 = vmatmul.mubr.bf16.gmra.mrb[0].mxu0 %v726
        %v764 = vpop.f32.mrb[0].mxu0
        %v765 = vadd.f32 0.0, %v764
        %v766 = vpop.f32.mrb[0].mxu0
        %v767 = vpop.f32.mrb[0].mxu0
        %v768 = vadd.f32 0.0, %v767
        %v769 = vpop.f32.mrb[0].mxu0
        %770 = vmatprep.mubr.bf16.mxu0 0
        %771 = vmatmul.mubr.bf16.gmra.mrb[0].mxu0 %v727
        %v772 = vpop.f32.mrb[0].mxu0
        %v773 = vadd.f32 0.0, %v772
        %v774 = vpop.f32.mrb[0].mxu0
        %v775 = vpop.f32.mrb[0].mxu0
        %v776 = vadd.f32 0.0, %v775
        %v777 = vpop.f32.mrb[0].mxu0
        %778 = vmatprep.mubr.bf16.mxu0 0
        %779 = vmatmul.mubr.bf16.gmra.mrb[0].mxu0 %v728
        %v780 = vpop.f32.mrb[0].mxu0
        %v781 = vadd.f32 0.0, %v780
        %v782 = vpop.f32.mrb[0].mxu0
        %v783 = vpop.f32.mrb[0].mxu0
        %v784 = vadd.f32 0.0, %v783
        %v785 = vpop.f32.mrb[0].mxu0
        %786 = vmatprep.mubr.bf16.mxu0 0
        %787 = vmatmul.mubr.bf16.gmra.mrb[0].mxu0 %v729
        %v788 = vpop.f32.mrb[0].mxu0
        %v789 = vadd.f32 0.0, %v788
        %v790 = vpop.f32.mrb[0].mxu0
        %v791 = vpop.f32.mrb[0].mxu0
        %v792 = vadd.f32 0.0, %v791
        %v793 = vpop.f32.mrb[0].mxu0
        %794 = vdwg.mxu0
        %v795 = vmul.f32 %v360, %v688
        %v796 = vmul.f32 %v364, %v691
        %v797 = vmul.f32 %v370, %v696
        %v798 = vmul.f32 %v374, %v699
        %v799 = vmul.f32 %v380, %v704
        %v800 = vmul.f32 %v384, %v707
        %v801 = vmul.f32 %v390, %v712
        %v802 = vmul.f32 %v394, %v715
        %v803 = vld [vmem:[%s4] sm:$0x1]
        %v805 = vlaneseq
        %v806 = vshrl.u32 %v805, 7
        %v807 = vsub.s32 0, %v806
        %v808 = vrot.slane %v803, %v807
        %v810 = vsub.f32 %v808, %v765
        %v811 = vsub.f32 %v808, %v768
        %v812 = vsub.f32 %v808, %v773
        %v813 = vsub.f32 %v808, %v776
        %v814 = vsub.f32 %v808, %v781
        %v815 = vsub.f32 %v808, %v784
        %v816 = vsub.f32 %v808, %v789
        %v817 = vsub.f32 %v808, %v792
        %v818 = vadd.f32 %v795, %v810
        %v819 = vadd.f32 %v796, %v811
        %v820 = vadd.f32 %v797, %v812
        %v821 = vadd.f32 %v798, %v813
        %v822 = vadd.f32 %v799, %v814
        %v823 = vadd.f32 %v800, %v815
        %v824 = vadd.f32 %v801, %v816
        %v825 = vadd.f32 %v802, %v817
        %826 = vst [vmem:[%s262] sm:$0xff] %v818
        %827 = vst [vmem:[%s262 + $0x8] sm:$0xff] %v819
        %828 = vst [vmem:[%s262 + $0x10] sm:$0xff] %v820
        %829 = vst [vmem:[%s262 + $0x18] sm:$0xff] %v821
        %830 = vst [vmem:[%s262 + $0x20] sm:$0xff] %v822
        %831 = vst [vmem:[%s262 + $0x28] sm:$0xff] %v823
        %832 = vst [vmem:[%s262 + $0x30] sm:$0xff] %v824
        %833 = vst [vmem:[%s262 + $0x38] sm:$0xff] %v825
        %s834 = sand.u32 %s153, 1
        %s835 = scalar_lea.sflag [#allocation4], %s834
        %s836 = sand.u32 %s153, 1
        %s837 = smul.addr %s836, 64
        %s838 = scalar_lea.vmem [#allocation7], %s837
        // Predicated region
        $region49: #{tpu_custom_call.1} parent=39 // pred_check
          %p839 = pneg %p163
        $region50: #{tpu_custom_call.1} parent=39 // pred_check_branch
          %841 = sbr.rel (%p839) target = $region52
        $region51: #{tpu_custom_call.1} parent=39 // pred_region
          %s842 = smul.u32 8, %s25
          %s844 = ssub.s32 1024, 1024
          %845 = vsyncadd %s835, %s844
          %s846 = smul.addr %s842, 4
          %s847 = sadd.s32 %s26, %s846
          %s848 = smul.addr %s847, 128
          %s849 = scalar_lea.hbm %s5, %s848
          %s850 = sshll.u32 %s838, 4
          %s851 = int_to_ptr.vmem [resolvable:$true] %s850
          %856 = dma.vmem_to_hbm [thread:$0]  %s851, 1024, %s849, %s835, 128, 512, 8
        $region52: #{tpu_custom_call.1} parent=39 // pred_fallthru
          _
      $region40: #{tpu_custom_call.1} parent=5 // pred_fallthru
        _
      %p857 = scmp.le.s32.totalorder 2, %s16
      // Predicated region
      $region53: #{tpu_custom_call.1} parent=5 // pred_check
        %p858 = pneg %p857
      $region54: #{tpu_custom_call.1} parent=5 // pred_check_branch
        %860 = sbr.rel (%p858) target = $region56
      $region55: #{tpu_custom_call.1} parent=5 // pred_region
        %s861 = ssub.s32 %s16, 2
        // Predicated region
        $region57: #{tpu_custom_call.1} parent=55 // pred_check
          %p862 = pneg %p169
        $region58: #{tpu_custom_call.1} parent=55 // pred_check_branch
          %864 = sbr.rel (%p862) target = $region60
        $region59: #{tpu_custom_call.1} parent=55 // pred_region
          %s865 = sand.u32 %s154, 1
          %s866 = scalar_lea.sflag [#allocation4], %s865
          %s867 = sand.u32 %s154, 1
          %s868 = smul.addr %s867, 64
          %s869 = scalar_lea.vmem [#allocation7], %s868
          %870 = dma.done %s866, 1024
        $region60: #{tpu_custom_call.1} parent=55 // pred_fallthru
          _
      $region56: #{tpu_custom_call.1} parent=5 // pred_fallthru
        _
    $region6: #{tpu_custom_call.1} parent=1 // loop_footer
      %s20 = sadd.s32 1, %s16
    $region7: #{tpu_custom_call.1} parent=1 // loop_footer_branch
      %15 = sbr.rel target = $region3
    $region8: #{tpu_custom_call.1} parent=1 // loop_exit
      _
    %871 = vsyncpa [#allocation3], 1
    %s872 = scalar_lea.sflag [#allocation3], 1
    %873 = vsyncpa %s872, 1
    %874 = vsyncpa [#allocation6], 1
    %875 = vsyncpa [#allocation4], 1
    %s876 = scalar_lea.sflag [#allocation4], 1
    %877 = vsyncpa %s876, 1

</llo_original>
